<compile_context>
chip_gen: v7x
topology: tpu7x:2x2x1
jax: 0.10.0
libtpu: 0.0.40
codegen_flags: <defaults>
</compile_context>

<pallas_src>
import functools

import jax
import jax.numpy as jnp
from jax.experimental import pallas as pl
from jax.experimental.pallas import tpu as pltpu


def _round_up(x, m):
    return ((x + m - 1) // m) * m


def _focal_loss_kernel(x_ref, s_ref, o_ref, acc_ref, *, gamma, n_rows,
                       tile_n, tiles_per_core, needs_mask):
    c = pl.program_id(0)          # TensorCore split ("parallel")
    i = pl.program_id(1)          # row-tile index within this core ("arbitrary")

    @pl.when(i == 0)
    def _init():
        acc_ref[...] = jnp.zeros_like(acc_ref)

    x = x_ref[...].astype(jnp.float32)            # (T, C) logits, cast in-kernel
    side = s_ref[...]                             # (T, 2) f32: [target, alpha[target]]
    t = side[:, 0:1].astype(jnp.int32)            # (T, 1) target class ids
    a = side[:, 1:2]                              # (T, 1) alpha[target]

    # Numerically-stable target log-probability: log_p = x[target] - logsumexp(x).
    m = jnp.max(x, axis=-1, keepdims=True)                               # (T, 1)
    lse = m + jnp.log(jnp.sum(jnp.exp(x - m), axis=-1, keepdims=True))   # (T, 1)
    ids = jax.lax.broadcasted_iota(jnp.int32, (1, x.shape[1]), 1)        # (1, C)
    x_t = jnp.sum(jnp.where(ids == t, x, 0.0), axis=-1, keepdims=True)   # (T, 1)
    log_p = x_t - lse                                                    # (T, 1)
    p = jnp.exp(log_p)                                                   # (T, 1)

    # (1 - p)^gamma: static unroll for small integer gamma (the common case).
    q = 1.0 - p
    g = float(gamma)
    if g == float(int(g)) and 0 <= int(g) <= 4:
        focal = jnp.ones_like(q)
        for _ in range(int(g)):
            focal = focal * q
    else:
        focal = jnp.power(q, g)

    loss = -a * focal * log_p                                            # (T, 1)

    if needs_mask:
        # Rows past the true batch size (partial last tile / clamped padding
        # tile).  Keep this a SELECT: padded rows may hold garbage logits whose
        # per-row loss is NaN/Inf, which a multiply-by-mask would propagate.
        base = (c * tiles_per_core + i) * tile_n
        row = base + jax.lax.broadcasted_iota(jnp.int32, (tile_n, 1), 0)
        loss = jnp.where(row < n_rows, loss, 0.0)

    # Per-row accumulation; the single cross-sublane reduce happens only once.
    acc_ref[...] += loss

    @pl.when(i == pl.num_programs(1) - 1)
    def _finalize():
        total = jnp.sum(acc_ref[...])
        o_ref[...] = jnp.full(o_ref.shape, total, dtype=o_ref.dtype)


def focal_loss(inputs, targets, alpha=None, gamma=2.0, size_average=True):
    """Pallas TPU implementation of FocalLoss.forward.

    inputs:  (N, C) float logits (any float dtype; cast to f32 inside kernel)
    targets: (N,)   int class indices
    alpha:   (C,) or (C, 1) float per-class weights (defaults to ones)
    """
    N, C = inputs.shape
    if alpha is None:
        alpha_flat = jnp.ones((C,), dtype=jnp.float32)
    else:
        alpha_flat = jnp.asarray(alpha, dtype=jnp.float32).reshape(-1)
    targets_flat = jnp.asarray(targets, dtype=jnp.int32).reshape(-1)

    # O(N) gather in the wrapper; targets + alpha[target] merged into a single
    # (N, 2) f32 side input so each grid step issues 2 DMAs instead of 3.
    side = jnp.stack(
        [targets_flat.astype(jnp.float32), alpha_flat[targets_flat]], axis=1)

    itemsize = jnp.dtype(inputs.dtype).itemsize
    # Byte-based tiling: ~1 MiB of logits per block (native dtype), rows a
    # multiple of 8, capped at 4096 rows so the lane-padded (T,1) per-row
    # intermediates and the (T,1) scratch stay comfortably inside scoped VMEM
    # on all generations (v7x: 64 MiB physical/TC; v5e default raised below).
    max_block_bytes = 1 * 1024 * 1024
    rows_by_bytes = (max_block_bytes // max(1, C * itemsize)) // 8 * 8
    tile_n = int(max(8, min(rows_by_bytes, 4096, _round_up(N, 8))))

    n_tiles = -(-N // tile_n)                  # ceil
    tiles_per_core = -(-n_tiles // 2)          # 2-way TC split (v7x megacore)
    needs_mask = (2 * tiles_per_core * tile_n) != N

    def tile_map(c, i):
        # Clamp so the (rare) padding tile when n_tiles is odd re-reads the
        # last valid tile; its rows are masked out in-kernel.
        return (jnp.minimum(c * tiles_per_core + i, n_tiles - 1), 0)

    kernel = functools.partial(
        _focal_loss_kernel,
        gamma=float(gamma),
        n_rows=N,
        tile_n=tile_n,
        tiles_per_core=tiles_per_core,
        needs_mask=bool(needs_mask),
    )

    cost = pl.CostEstimate(
        flops=8 * N * C + 24 * N,
        transcendentals=N * C + 3 * N,
        bytes_accessed=N * C * itemsize + N * 8 + 2 * 8 * 128 * 4,
    )

    out = pl.pallas_call(
        kernel,
        out_shape=jax.ShapeDtypeStruct((16, 128), jnp.float32),  # 2 per-core partials
        grid=(2, tiles_per_core),
        in_specs=[
            pl.BlockSpec((tile_n, C), tile_map),   # logits, streamed in native dtype
            pl.BlockSpec((tile_n, 2), tile_map),   # [target, alpha[target]] f32
        ],
        out_specs=pl.BlockSpec((8, 128), lambda c, i: (c, 0)),
        scratch_shapes=[pltpu.VMEM((tile_n, 1), jnp.float32)],
        compiler_params=pltpu.CompilerParams(
            dimension_semantics=("parallel", "arbitrary"),
            vmem_limit_bytes=32 * 1024 * 1024,
        ),
        cost_estimate=cost,
    )(inputs, side)

    total = out[0, 0] + out[8, 0]
    if size_average:
        total = total / N
    return total


def _focal_loss_ref(inputs, targets, alpha, gamma=2.0, size_average=True):
    """Pure-JAX reference mirroring the PyTorch module."""
    N, C = inputs.shape
    p = jax.nn.softmax(inputs.astype(jnp.float32), axis=1)
    mask = jax.nn.one_hot(targets, C, dtype=jnp.float32)
    probs = jnp.sum(p * mask, axis=1, keepdims=True)
    a = alpha.reshape(-1)[targets].reshape(-1, 1)
    batch_loss = -a * jnp.power(1.0 - probs, gamma) * jnp.log(probs)
    return jnp.mean(batch_loss) if size_average else jnp.sum(batch_loss)


if __name__ == "__main__":
    key = jax.random.PRNGKey(0)
    k1, k2, k3, k4, k5, k6 = jax.random.split(key, 6)

    # Small shapes consistent with the module: batch=8 logits over class_num=32.
    N, C = 8, 32
    logits = jax.random.normal(k1, (N, C), dtype=jnp.float32)
    targets = jax.random.randint(k2, (N,), 0, C, dtype=jnp.int32)
    alpha = jnp.ones((C, 1), dtype=jnp.float32)   # FocalLoss(alpha=None) default

    loss = focal_loss(logits, targets, alpha=alpha, gamma=2.0, size_average=True)
    loss = jax.block_until_ready(loss)
    ref = _focal_loss_ref(logits, targets, alpha, gamma=2.0, size_average=True)
    assert jnp.allclose(loss, ref, rtol=1e-5, atol=1e-5), (loss, ref)

    # Mid batch: exercises the 2-core split with a fully-masked second core.
    N2 = 1200
    logits2 = jax.random.normal(k3, (N2, C), dtype=jnp.float32)
    targets2 = jax.random.randint(k4, (N2,), 0, C, dtype=jnp.int32)
    loss2 = focal_loss(logits2, targets2, alpha=alpha, gamma=2.0,
                       size_average=True)
    loss2 = jax.block_until_ready(loss2)
    ref2 = _focal_loss_ref(logits2, targets2, alpha, gamma=2.0,
                           size_average=True)
    assert jnp.allclose(loss2, ref2, rtol=1e-5, atol=1e-5), (loss2, ref2)

    # size_average=False (sum) path.
    loss3 = focal_loss(logits2, targets2, alpha=alpha, gamma=2.0,
                       size_average=False)
    loss3 = jax.block_until_ready(loss3)
    ref3 = _focal_loss_ref(logits2, targets2, alpha, gamma=2.0,
                           size_average=False)
    assert jnp.allclose(loss3, ref3, rtol=1e-5, atol=1e-3), (loss3, ref3)

    # Larger batch: multiple inner tiles per core, partial last tile and a
    # clamped (fully masked) padding tile on core 1.
    N3 = 9000
    logits3 = jax.random.normal(k5, (N3, C), dtype=jnp.float32)
    targets3 = jax.random.randint(k6, (N3,), 0, C, dtype=jnp.int32)
    loss4 = focal_loss(logits3, targets3, alpha=alpha, gamma=2.0,
                       size_average=True)
    loss4 = jax.block_until_ready(loss4)
    ref4 = _focal_loss_ref(logits3, targets3, alpha, gamma=2.0,
                           size_average=True)
    assert jnp.allclose(loss4, ref4, rtol=1e-4, atol=1e-5), (loss4, ref4)

    print("KERNEL_OK")
</pallas_src>

<mosaic_0001>
module attributes {stable_mosaic.version = 11 : i64} {
  func.func @_focal_loss_kernel(%arg0: i32, %arg1: i32, %arg2: memref<8x32xf32, #tpu.memory_space<vmem>>, %arg3: memref<8x2xf32, #tpu.memory_space<vmem>>, %arg4: memref<8x128xf32, #tpu.memory_space<vmem>>, %arg5: memref<8x1xf32, #tpu.memory_space<vmem>>) attributes {dimension_semantics = [#tpu.dimension_semantics<parallel>, #tpu.dimension_semantics<arbitrary>], iteration_bounds = array<i64: 2, 1>, scalar_prefetch = 0 : i64, scratch_operands = 1 : i64, tpu.core_type = #tpu.core_type<tc>, window_params = [{transform_indices = @transform_0, window_bounds = array<i64: 8, 32>}, {transform_indices = @transform_1, window_bounds = array<i64: 8, 2>}, {transform_indices = @transform_2, window_bounds = array<i64: 8, 128>}]} {
    %c0_i32 = arith.constant 0 : i32
    %0 = arith.cmpi eq, %arg1, %c0_i32 : i32
    %1 = arith.extui %0 : i1 to i32
    %c0_i32_0 = arith.constant 0 : i32
    %2 = arith.cmpi ne, %1, %c0_i32_0 : i32
    scf.if %2 {
      %cst_18 = arith.constant 0.000000e+00 : f32
      %52 = vector.broadcast %cst_18 : f32 to vector<8x1xf32>
      %c0_19 = arith.constant 0 : index
      %c0_20 = arith.constant 0 : index
      %53 = vector.load %arg5[%c0_19, %c0_20] : memref<8x1xf32, #tpu.memory_space<vmem>>, vector<8x1xf32>
      tpu.vector_store %arg5[%c0_19, %c0_20], %52 {strides = array<i32>} : memref<8x1xf32, #tpu.memory_space<vmem>>, vector<8x1xf32>,
    } else {
    }
    %c0 = arith.constant 0 : index
    %c0_1 = arith.constant 0 : index
    %3 = vector.load %arg2[%c0, %c0_1] : memref<8x32xf32, #tpu.memory_space<vmem>>, vector<8x32xf32>
    %c0_2 = arith.constant 0 : index
    %c0_3 = arith.constant 0 : index
    %4 = vector.load %arg3[%c0_2, %c0_3] : memref<8x2xf32, #tpu.memory_space<vmem>>, vector<8x2xf32>
    %5 = vector.extract_strided_slice %4 {offsets = [0, 0], sizes = [8, 1], strides = [1, 1]} : vector<8x2xf32> to vector<8x1xf32>
    %6 = arith.fptosi %5 : vector<8x1xf32> to vector<8x1xi32>
    %7 = vector.extract_strided_slice %4 {offsets = [0, 1], sizes = [8, 1], strides = [1, 1]} : vector<8x2xf32> to vector<8x1xf32>
    %cst = arith.constant dense<0xFF800000> : vector<8xf32>
    %8 = vector.multi_reduction <maximumf>, %3, %cst [1] : vector<8x32xf32> to vector<8xf32>
    %9 = vector.shape_cast %8 : vector<8xf32> to vector<8x1xf32>
    %10 = vector.broadcast %9 : vector<8x1xf32> to vector<8x32xf32>
    %11 = arith.subf %3, %10 : vector<8x32xf32>
    %12 = math.exp %11 : vector<8x32xf32>
    %cst_4 = arith.constant dense<0.000000e+00> : vector<8xf32>
    %13 = vector.multi_reduction <add>, %12, %cst_4 [1] : vector<8x32xf32> to vector<8xf32>
    %14 = vector.shape_cast %13 : vector<8xf32> to vector<8x1xf32>
    %15 = math.log %14 : vector<8x1xf32>
    %16 = arith.addf %9, %15 : vector<8x1xf32>
    %17 = tpu.iota {dimensions = array<i32: 1>} : vector<1x32xi32>
    %18 = vector.broadcast %17 : vector<1x32xi32> to vector<8x32xi32>
    %19 = vector.broadcast %6 : vector<8x1xi32> to vector<8x32xi32>
    %20 = arith.cmpi eq, %18, %19 : vector<8x32xi32>
    %cst_5 = arith.constant 0.000000e+00 : f32
    %21 = vector.broadcast %cst_5 : f32 to vector<8x32xf32>
    %22 = arith.select %20, %3, %21 : vector<8x32xi1>, vector<8x32xf32>
    %cst_6 = arith.constant dense<0.000000e+00> : vector<8xf32>
    %23 = vector.multi_reduction <add>, %22, %cst_6 [1] : vector<8x32xf32> to vector<8xf32>
    %24 = vector.shape_cast %23 : vector<8xf32> to vector<8x1xf32>
    %25 = arith.subf %24, %16 : vector<8x1xf32>
    %26 = math.exp %25 : vector<8x1xf32>
    %cst_7 = arith.constant 1.000000e+00 : f32
    %27 = vector.broadcast %cst_7 : f32 to vector<8x1xf32>
    %28 = arith.subf %27, %26 : vector<8x1xf32>
    %cst_8 = arith.constant 1.000000e+00 : f32
    %29 = vector.broadcast %cst_8 : f32 to vector<8x1xf32>
    %30 = arith.mulf %29, %28 : vector<8x1xf32>
    %31 = arith.mulf %30, %28 : vector<8x1xf32>
    %cst_9 = arith.constant 0.000000e+00 : f32
    %32 = vector.broadcast %cst_9 : f32 to vector<8x1xf32>
    %33 = arith.subf %32, %7 : vector<8x1xf32>
    %34 = arith.mulf %33, %31 : vector<8x1xf32>
    %35 = arith.mulf %34, %25 : vector<8x1xf32>
    %c1_i32 = arith.constant 1 : i32
    %36 = arith.muli %arg0, %c1_i32 : i32
    %37 = arith.addi %36, %arg1 : i32
    %c8_i32 = arith.constant 8 : i32
    %38 = arith.muli %37, %c8_i32 : i32
    %39 = tpu.iota {dimensions = array<i32: 0>} : vector<8x1xi32>
    %40 = vector.broadcast %38 : i32 to vector<8x1xi32>
    %41 = arith.addi %40, %39 : vector<8x1xi32>
    %c8_i32_10 = arith.constant 8 : i32
    %42 = vector.broadcast %c8_i32_10 : i32 to vector<8x1xi32>
    %43 = arith.cmpi slt, %41, %42 : vector<8x1xi32>
    %cst_11 = arith.constant 0.000000e+00 : f32
    %44 = vector.broadcast %cst_11 : f32 to vector<8x1xf32>
    %45 = arith.select %43, %35, %44 : vector<8x1xi1>, vector<8x1xf32>
    %c0_12 = arith.constant 0 : index
    %c0_13 = arith.constant 0 : index
    %46 = vector.load %arg5[%c0_12, %c0_13] : memref<8x1xf32, #tpu.memory_space<vmem>>, vector<8x1xf32>
    %47 = arith.addf %46, %45 : vector<8x1xf32>
    %c0_14 = arith.constant 0 : index
    %c0_15 = arith.constant 0 : index
    %48 = vector.load %arg5[%c0_14, %c0_15] : memref<8x1xf32, #tpu.memory_space<vmem>>, vector<8x1xf32>
    tpu.vector_store %arg5[%c0_14, %c0_15], %47 {strides = array<i32>} : memref<8x1xf32, #tpu.memory_space<vmem>>, vector<8x1xf32>,
    %c0_i32_16 = arith.constant 0 : i32
    %49 = arith.cmpi eq, %arg1, %c0_i32_16 : i32
    %50 = arith.extui %49 : i1 to i32
    %c0_i32_17 = arith.constant 0 : i32
    %51 = arith.cmpi ne, %50, %c0_i32_17 : i32
    scf.if %51 {
      %c0_18 = arith.constant 0 : index
      %c0_19 = arith.constant 0 : index
      %52 = vector.load %arg5[%c0_18, %c0_19] : memref<8x1xf32, #tpu.memory_space<vmem>>, vector<8x1xf32>
      %53 = vector.shape_cast %52 : vector<8x1xf32> to vector<1x8x1xf32>
      %cst_20 = arith.constant dense<0.000000e+00> : vector<1xf32>
      %54 = vector.multi_reduction <add>, %53, %cst_20 [1, 2] : vector<1x8x1xf32> to vector<1xf32>
      %55 = vector.shape_cast %54 : vector<1xf32> to vector<1x1x1xf32>
      %56 = vector.extract %55[0, 0, 0] : f32 from vector<1x1x1xf32>
      %57 = vector.broadcast %56 : f32 to vector<8x128xf32>
      %c0_21 = arith.constant 0 : index
      %c0_22 = arith.constant 0 : index
      %58 = vector.load %arg4[%c0_21, %c0_22] : memref<8x128xf32, #tpu.memory_space<vmem>>, vector<8x128xf32>
      tpu.vector_store %arg4[%c0_21, %c0_22], %57 {strides = array<i32>} : memref<8x128xf32, #tpu.memory_space<vmem>>, vector<8x128xf32>,
    } else {
    }
    return
  }
  func.func @transform_0(%arg0: i32, %arg1: i32) -> (i32, i32) {
    %c1_i32 = arith.constant 1 : i32
    %0 = arith.muli %arg0, %c1_i32 : i32
    %1 = arith.addi %0, %arg1 : i32
    %c0_i32 = arith.constant 0 : i32
    %2 = arith.minsi %1, %c0_i32 : i32
    %c0_i32_0 = arith.constant 0 : i32
    %c0_i32_1 = arith.constant 0 : i32
    return %2, %c0_i32_0 : i32, i32
  }
  func.func @transform_1(%arg0: i32, %arg1: i32) -> (i32, i32) {
    %c1_i32 = arith.constant 1 : i32
    %0 = arith.muli %arg0, %c1_i32 : i32
    %1 = arith.addi %0, %arg1 : i32
    %c0_i32 = arith.constant 0 : i32
    %2 = arith.minsi %1, %c0_i32 : i32
    %c0_i32_0 = arith.constant 0 : i32
    %c0_i32_1 = arith.constant 0 : i32
    return %2, %c0_i32_0 : i32, i32
  }
  func.func @transform_2(%arg0: i32, %arg1: i32) -> (i32, i32) {
    %c0_i32 = arith.constant 0 : i32
    %c0_i32_0 = arith.constant 0 : i32
    return %arg0, %c0_i32 : i32, i32
  }
}

</mosaic_0001>

<llo_original>
// kernel: tpu_custom_call.1
$region0: #{tpu_custom_call.1}
  #allocation0 [shape = 'u32[]', space=smem, size = 0x4, offset = 0x4, fixed_abs, tag = 'smem constant byte address 0x4 - core index']
  #allocation1 [shape = 'u32[144,128]{1,0:T(1,128)}', space=vmem, size = 0x12000, scoped, tag = 'internal scratch']
  #allocation2 [shape = 'f32[8,1]{1,0:T(8,128)}', space=vmem, size = 0x1000, scoped, tag = 'scratch operand']
  %s0 = inlined_call_operand.vmem [shape: f32[8,32], index: 0, kind: input, shape index: {}]
  %s1 = inlined_call_operand.vmem [shape: f32[8,2], index: 1, kind: input, shape index: {}]
  %s2 = inlined_call_operand.hbm [shape: f32[16,128], index: 2, kind: output, shape index: {}]
  %s3 = sld [smem:[#allocation0]]
  $region49: #{tpu_custom_call.1} parent=0
    _
  %s5 = ssub.s32 1, %s3
  %s6 = scalar_select 0, %s5, %s3
  $region1: #{tpu_custom_call.1} parent=0
    #allocation3 [shape = 'u8[8192]{0}', space=vmem, size = 0x2000, scoped, tag = 'output window, operand 0']
    #allocation4 [shape = 's32[2]{0}', space=sflag, size = 0x8, scoped, tag = 'scoped memory for tpu_custom_call.1']
    %7 = vsyncpa [#allocation4], 0
    %s8 = scalar_lea.sflag [#allocation4], 1
    %9 = vsyncpa %s8, 0
    loop: start=0, step=1, limit=4
    $region2: #{tpu_custom_call.1} parent=1 // loop_pre_header
      _
    $region3: #{tpu_custom_call.1} parent=1 // loop_header
      %s11 = sphi 0, %s15
      %p12 = scmp.ge.s32.totalorder %s11, 4
      %s18 = sphi 0, %s30
      %s19 = sphi 0, %s26
      %s20 = sphi 0, %s18
      %s21 = sphi 0, %s19
      %s22 = sphi 0, %s20
      %s23 = sphi 0, %s21
      %s39 = sphi 0, %s41
      %s42 = sphi 0, %s39
      %s43 = sphi 0, %s42
      %s59 = sphi 0, %s43
      %s71 = sphi 0, %s73
      %s74 = sphi 0, %s71
      %s75 = sphi 0, %s74
      %s91 = sphi 0, %s75
      %s97 = sphi 0, %s99
      %s100 = sphi 0, %s97
      %s101 = sphi 0, %s100
      %s117 = sphi 0, %s101
    $region4: #{tpu_custom_call.1} parent=1 // loop_header_branch
      %14 = sbr.rel (%p12) target = $region8
    $region5: #{tpu_custom_call.1} parent=1 // loop_body
      %s16 = ssub.s32 %s11, 1
      %s17 = ssub.s32 %s11, 2
      %s24 = sadd.s32 1, %s19
      %p25 = scmp.ge.s32.totalorder %s24, 1
      %s26 = scalar_select %p25, 0, %s24
      %s27 = sadd.s32 1, %s18
      %s28 = scalar_select %p25, %s27, %s18
      %p29 = scmp.ge.s32.totalorder %s28, 2
      %s30 = scalar_select %p29, 0, %s28
      %s31 = sadd.s32 %s18, %s19
      %p32 = scmp.lt.s32.totalorder %s31, 0
      %s33 = scalar_select %p32, %s31, 0
      %s34 = sadd.s32 %s30, %s26
      %p35 = scmp.lt.s32.totalorder %s34, 0
      %s36 = scalar_select %p35, %s34, 0
      %s37 = ssub.s32 %s33, %s36
      %p38 = scmp.eq.s32.totalorder %s37, 0
      %s40 = sadd.s32 %s39, 1
      %s41 = scalar_select %p38, %s39, %s40
      %p44 = pneg %p38
      %p45 = scmp.eq.s32.totalorder %s11, 1
      %p46 = por %p44, %p45
      %p47 = scmp.ne.s32.totalorder %s39, %s42
      %p48 = scmp.eq.s32.totalorder %s11, 0
      %p49 = por %p47, %p48
      %p50 = scmp.ne.s32.totalorder %s39, %s42
      %p51 = scmp.eq.s32.totalorder %s16, 1
      %p52 = por %p50, %p51
      %p53 = scmp.ne.s32.totalorder %s42, %s43
      %p54 = scmp.eq.s32.totalorder %s16, 0
      %p55 = por %p53, %p54
      %p56 = scmp.ne.s32.totalorder %s42, %s43
      %p57 = scmp.eq.s32.totalorder %s17, 1
      %p58 = por %p56, %p57
      %p60 = scmp.ne.s32.totalorder %s43, %s59
      %p61 = scmp.eq.s32.totalorder %s17, 0
      %p62 = por %p60, %p61
      %s63 = sadd.s32 %s18, %s19
      %p64 = scmp.lt.s32.totalorder %s63, 0
      %s65 = scalar_select %p64, %s63, 0
      %s66 = sadd.s32 %s30, %s26
      %p67 = scmp.lt.s32.totalorder %s66, 0
      %s68 = scalar_select %p67, %s66, 0
      %s69 = ssub.s32 %s65, %s68
      %p70 = scmp.eq.s32.totalorder %s69, 0
      %s72 = sadd.s32 %s71, 1
      %s73 = scalar_select %p70, %s71, %s72
      %p76 = pneg %p70
      %p77 = scmp.eq.s32.totalorder %s11, 1
      %p78 = por %p76, %p77
      %p79 = scmp.ne.s32.totalorder %s71, %s74
      %p80 = scmp.eq.s32.totalorder %s11, 0
      %p81 = por %p79, %p80
      %p82 = scmp.ne.s32.totalorder %s71, %s74
      %p83 = scmp.eq.s32.totalorder %s16, 1
      %p84 = por %p82, %p83
      %p85 = scmp.ne.s32.totalorder %s74, %s75
      %p86 = scmp.eq.s32.totalorder %s16, 0
      %p87 = por %p85, %p86
      %p88 = scmp.ne.s32.totalorder %s74, %s75
      %p89 = scmp.eq.s32.totalorder %s17, 1
      %p90 = por %p88, %p89
      %p92 = scmp.ne.s32.totalorder %s75, %s91
      %p93 = scmp.eq.s32.totalorder %s17, 0
      %p94 = por %p92, %p93
      %s95 = ssub.s32 %s18, %s30
      %p96 = scmp.eq.s32.totalorder %s95, 0
      %s98 = sadd.s32 %s97, 1
      %s99 = scalar_select %p96, %s97, %s98
      %p102 = pneg %p96
      %p103 = scmp.eq.s32.totalorder %s11, 1
      %p104 = por %p102, %p103
      %p105 = scmp.ne.s32.totalorder %s97, %s100
      %p106 = scmp.eq.s32.totalorder %s11, 0
      %p107 = por %p105, %p106
      %p108 = scmp.ne.s32.totalorder %s97, %s100
      %p109 = scmp.eq.s32.totalorder %s16, 1
      %p110 = por %p108, %p109
      %p111 = scmp.ne.s32.totalorder %s100, %s101
      %p112 = scmp.eq.s32.totalorder %s16, 0
      %p113 = por %p111, %p112
      %p114 = scmp.ne.s32.totalorder %s100, %s101
      %p115 = scmp.eq.s32.totalorder %s17, 1
      %p116 = por %p114, %p115
      %p118 = scmp.ne.s32.totalorder %s101, %s117
      %p119 = scmp.eq.s32.totalorder %s17, 0
      %p120 = por %p118, %p119
      %p121 = scmp.le.s32.totalorder 1, %s11
      %p122 = scmp.lt.s32.totalorder %s11, 3
      %p123 = pnand %p121, %p122
      %p124 = pneg %p123
      // Predicated region
      $region9: #{tpu_custom_call.1} parent=5 // pred_check
        _
      $region10: #{tpu_custom_call.1} parent=5 // pred_check_branch
        %126 = sbr.rel (%p123) target = $region12
      $region11: #{tpu_custom_call.1} parent=5 // pred_region
        %s127 = ssub.s32 %s11, 1
      $region12: #{tpu_custom_call.1} parent=5 // pred_fallthru
        _
      %p128 = scmp.lt.s32.totalorder %s11, 2
      // Predicated region
      $region13: #{tpu_custom_call.1} parent=5 // pred_check
        %p129 = pneg %p128
      $region14: #{tpu_custom_call.1} parent=5 // pred_check_branch
        %131 = sbr.rel (%p129) target = $region16
      $region15: #{tpu_custom_call.1} parent=5 // pred_region
        // Predicated region
        $region17: #{tpu_custom_call.1} parent=15 // pred_check
          %p132 = pneg %p49
        $region18: #{tpu_custom_call.1} parent=15 // pred_check_branch
          %134 = sbr.rel (%p132) target = $region20
        $region19: #{tpu_custom_call.1} parent=15 // pred_region
          %s135 = sadd.s32 %s18, %s19
          %p136 = scmp.lt.s32.totalorder %s135, 0
          %s137 = scalar_select %p136, %s135, 0
          %p138 = scmp.lt.s32.totalorder %s137, 0
          %s139 = scalar_select %p138, %s137, 0
          %s140 = smul.addr %s139, 8
          %s141 = scalar_lea.vmem %s0, %s140
          %s142 = sadd.s32 %s18, %s19
          %p143 = scmp.lt.s32.totalorder %s142, 0
          %s144 = scalar_select %p143, %s142, 0
        $region20: #{tpu_custom_call.1} parent=15 // pred_fallthru
          _
        // Predicated region
        $region21: #{tpu_custom_call.1} parent=15 // pred_check
          %p145 = pneg %p81
        $region22: #{tpu_custom_call.1} parent=15 // pred_check_branch
          %147 = sbr.rel (%p145) target = $region24
        $region23: #{tpu_custom_call.1} parent=15 // pred_region
          %s148 = sadd.s32 %s18, %s19
          %p149 = scmp.lt.s32.totalorder %s148, 0
          %s150 = scalar_select %p149, %s148, 0
          %p151 = scmp.lt.s32.totalorder %s150, 0
          %s152 = scalar_select %p151, %s150, 0
          %s153 = smul.addr %s152, 8
          %s154 = scalar_lea.vmem %s1, %s153
          %s155 = sadd.s32 %s18, %s19
          %p156 = scmp.lt.s32.totalorder %s155, 0
          %s157 = scalar_select %p156, %s155, 0
        $region24: #{tpu_custom_call.1} parent=15 // pred_fallthru
          _
      $region16: #{tpu_custom_call.1} parent=5 // pred_fallthru
        _
      %p158 = scmp.le.s32.totalorder 1, %s11
      %p159 = scmp.lt.s32.totalorder %s11, 3
      %p160 = pnand %p158, %p159
      %p161 = pneg %p160
      // Predicated region
      $region25: #{tpu_custom_call.1} parent=5 // pred_check
        _
      $region26: #{tpu_custom_call.1} parent=5 // pred_check_branch
        %163 = sbr.rel (%p160) target = $region28
      $region27: #{tpu_custom_call.1} parent=5 // pred_region
        %s164 = ssub.s32 %s11, 1
        %s165 = sadd.s32 %s20, %s21
        %p166 = scmp.lt.s32.totalorder %s165, 0
        %s167 = scalar_select %p166, %s165, 0
        %p168 = scmp.lt.s32.totalorder %s167, 0
        %s169 = scalar_select %p168, %s167, 0
        %s170 = smul.addr %s169, 8
        %s171 = scalar_lea.vmem %s0, %s170
        %p172 = pneg %p55
        %p173 = pneg %p52
        %s174 = sadd.s32 %s20, %s21
        %p175 = scmp.lt.s32.totalorder %s174, 0
        %s176 = scalar_select %p175, %s174, 0
        %p177 = scmp.lt.s32.totalorder %s176, 0
        %s178 = scalar_select %p177, %s176, 0
        %s179 = smul.addr %s178, 8
        %s180 = scalar_lea.vmem %s1, %s179
        %p181 = pneg %p87
        %p182 = pneg %p84
        %p183 = pneg %p113
        %p184 = pneg %p110
        %s185 = sand.u32 %s100, 1
        %s186 = scalar_lea.sflag [#allocation4], %s185
        %s187 = sand.u32 %s100, 1
        %s188 = smul.addr %s187, 8
        %s189 = scalar_lea.vmem [#allocation3], %s188
        %s190 = sadd.s32 %s20, %s21
        %p191 = scmp.lt.s32.totalorder %s190, 0
        %s192 = scalar_select %p191, %s190, 0
        %p193 = scmp.lt.s32.totalorder %s192, 0
        %s194 = scalar_select %p193, %s192, 0
        %s195 = smul.addr %s194, 8
        %s196 = scalar_lea.vmem %s0, %s195
        %s197 = sadd.s32 %s20, %s21
        %p198 = scmp.lt.s32.totalorder %s197, 0
        %s199 = scalar_select %p198, %s197, 0
        %s200 = sadd.s32 %s20, %s21
        %p201 = scmp.lt.s32.totalorder %s200, 0
        %s202 = scalar_select %p201, %s200, 0
        %p203 = scmp.lt.s32.totalorder %s202, 0
        %s204 = scalar_select %p203, %s202, 0
        %s205 = smul.addr %s204, 8
        %s206 = scalar_lea.vmem %s1, %s205
        %s207 = sadd.s32 %s20, %s21
        %p208 = scmp.lt.s32.totalorder %s207, 0
        %s209 = scalar_select %p208, %s207, 0
        %p210 = scmp.eq.s32.totalorder %s21, 0
        // Predicated region
        $region29: #{tpu_custom_call.1} parent=27 // pred_check
          %p211 = pneg %p210
        $region30: #{tpu_custom_call.1} parent=27 // pred_check_branch
          %213 = sbr.rel (%p211) target = $region32
        $region31: #{tpu_custom_call.1} parent=27 // pred_region
          %vm214 = vcmask 7168
          %215 = vst.msk [vmem:[#allocation2] sm:$0xff] %vm214, 0.0
        $region32: #{tpu_custom_call.1} parent=27 // pred_fallthru
          _
        %v216 = vld [vmem:[%s196] sm:$0xff]
        %v217 = vld [vmem:[%s206] sm:$0xff]
        %v218 = vcvt.f32.s32.to.zero.pseudo %v217
        %vm219 = vcmask 261120
        %v220 = vsel %vm219, %v216, -inf
        %221 = vmax.xlane.f32.xlu0 %v220
        %v222 = vpop.xlane.xlu0 %221
        %v223 = vsub.f32 %v216, %v222
        %v224 = vmul.f32 %v223, 1.442695
        %v225 = vpow.pop %v224
        %v226 = vsel %vm219, %v225, 0.0
        %227 = vadd.xlane.f32.xlu0 %v226
        %v228 = vpop.xlane.xlu0 %227
        %v229 = vlog2.pop %v228
        %v230 = vmul.f32 %v229, 0.6931472
        %v231 = vadd.f32 %v222, %v230
        %v232 = vlaneseq
        %v233 = vand.u32 %v232, 127
        %234 = vset.pattern.permute.xlu0 0
        %235 = vperm.xlu0 %234, %v218
        %v236 = vpop.permute.xlu0 %235
        %vm237 = vcmp.eq.s32.totalorder %v233, %v236
        %v238 = vsel %vm237, %v216, 0.0
        %v239 = vsel %vm219, %v238, 0.0
        %240 = vadd.xlane.f32.xlu0 %v239
        %v241 = vpop.xlane.xlu0 %240
        %v242 = vsub.f32 %v241, %v231
        %v243 = vmul.f32 %v242, 1.442695
        %v244 = vpow.pop %v243
        %v245 = vsub.f32 1.0, %v244
        %v246 = vmul.f32 %v245, %v245
        %v247 = vsub.f32 0.0, %v217
        %v248 = vmul.f32 %v247, %v246
        %v249 = vmul.f32 %v248, %v242
        %s250 = sadd.s32 %s20, %s21
        %s251 = smul.u32 %s250, 8
        %v252 = vlaneseq
        %v253 = vshrl.u32 %v252, 7
        %v254 = vstv %s251
        %v255 = vadd.s32 %v254, %v253
        %vm256 = vcmp.lt.s32.totalorder %v255, 8
        %v257 = vsel %vm256, %v249, 0.0
        %v258 = vld [vmem:[#allocation2] sm:$0xff]
        %260 = vrot.lane.b32.xlu0 %v257, 127
        %v261 = vpop.permute.xlu0 %260
        %v263 = vadd.f32 %v258, %v261
        %vm264 = vcmask 7168
        %265 = vst.msk [vmem:[#allocation2] sm:$0xff] %vm264, %v263
        // Predicated region
        $region33: #{tpu_custom_call.1} parent=27 // pred_check
          %p266 = pneg %p210
        $region34: #{tpu_custom_call.1} parent=27 // pred_check_branch
          %268 = sbr.rel (%p266) target = $region36
        $region35: #{tpu_custom_call.1} parent=27 // pred_region
          %v269 = vld [vmem:[#allocation2] sm:$0xff]
          %v270 = vsel %vm264, %v269, 0.0
          %271 = vadd.xlane.f32.xlu0 %v270
          %v272 = vpop.xlane.xlu0 %271
          %v273 = vrot.slane %v272, 4
          %v274 = vadd.f32 %v272, %v273
          %v275 = vrot.slane %v274, 2
          %v276 = vadd.f32 %v274, %v275
          %v277 = vrot.slane %v276, 1
          %v278 = vadd.f32 %v276, %v277
          %s279 = vtos %v278
          %v280 = vstv %s279
          %281 = vst [vmem:[%s189] sm:$0xff] %v280
        $region36: #{tpu_custom_call.1} parent=27 // pred_fallthru
          _
        %s282 = sand.u32 %s100, 1
        %s283 = scalar_lea.sflag [#allocation4], %s282
        %s284 = sand.u32 %s100, 1
        %s285 = smul.addr %s284, 8
        %s286 = scalar_lea.vmem [#allocation3], %s285
        // Predicated region
        $region37: #{tpu_custom_call.1} parent=27 // pred_check
          %p287 = pneg %p110
        $region38: #{tpu_custom_call.1} parent=27 // pred_check_branch
          %289 = sbr.rel (%p287) target = $region40
        $region39: #{tpu_custom_call.1} parent=27 // pred_region
          %s291 = ssub.s32 128, 128
          %292 = vsyncadd %s283, %s291
          %s293 = smul.addr %s20, 128
          %s294 = scalar_lea.hbm %s2, %s293
          %s296 = sshll.u32 %s286, 4
          %s297 = int_to_ptr.vmem [resolvable:$true] %s296
          %299 = dma.vmem_to_hbm [thread:$0]  %s297, 128, %s294, %s283
        $region40: #{tpu_custom_call.1} parent=27 // pred_fallthru
          _
      $region28: #{tpu_custom_call.1} parent=5 // pred_fallthru
        _
      %p300 = scmp.le.s32.totalorder 2, %s11
      // Predicated region
      $region41: #{tpu_custom_call.1} parent=5 // pred_check
        %p301 = pneg %p300
      $region42: #{tpu_custom_call.1} parent=5 // pred_check_branch
        %303 = sbr.rel (%p301) target = $region44
      $region43: #{tpu_custom_call.1} parent=5 // pred_region
        %s304 = ssub.s32 %s11, 2
        // Predicated region
        $region45: #{tpu_custom_call.1} parent=43 // pred_check
          %p305 = pneg %p116
        $region46: #{tpu_custom_call.1} parent=43 // pred_check_branch
          %307 = sbr.rel (%p305) target = $region48
        $region47: #{tpu_custom_call.1} parent=43 // pred_region
          %s308 = sand.u32 %s101, 1
          %s309 = scalar_lea.sflag [#allocation4], %s308
          %s310 = sand.u32 %s101, 1
          %s311 = smul.addr %s310, 8
          %s312 = scalar_lea.vmem [#allocation3], %s311
          %313 = dma.done %s309, 128
        $region48: #{tpu_custom_call.1} parent=43 // pred_fallthru
          _
      $region44: #{tpu_custom_call.1} parent=5 // pred_fallthru
        _
    $region6: #{tpu_custom_call.1} parent=1 // loop_footer
      %s15 = sadd.s32 1, %s11
    $region7: #{tpu_custom_call.1} parent=1 // loop_footer_branch
      %10 = sbr.rel target = $region3
    $region8: #{tpu_custom_call.1} parent=1 // loop_exit
      _
    %314 = vsyncpa [#allocation4], 1
    %s315 = scalar_lea.sflag [#allocation4], 1
    %316 = vsyncpa %s315, 1

</llo_original>
